<compile_context>
chip_gen: v6e
topology: v6e:2x2x1
jax: 0.10.0
libtpu: 0.0.40
codegen_flags: <defaults>
</compile_context>

<pallas_src>
import jax
import jax.numpy as jnp
from jax.experimental import pallas as pl
from jax.experimental.pallas import tpu as pltpu


def _head_kernel(x_ref, w_ref, b_ref, o_ref):
    # x_ref: (tb, P, D)   w_ref: (D, L)   b_ref: (1, L)   o_ref: (tb, P, L)
    tb, P, D = x_ref.shape
    L = w_ref.shape[-1]
    x2 = x_ref[...].reshape(tb * P, D)                      # free fold when P % 8 == 0
    out = jnp.dot(x2, w_ref[...], preferred_element_type=jnp.float32)
    out = out + b_ref[...].astype(jnp.float32)              # f32 VPU add (v5e: no bf16 VALU)
    o_ref[...] = out.reshape(tb, P, L).astype(o_ref.dtype)


def head_forward(x, weights, biases, *, batch_tile=None):
    """x: (B, n_vars, P, D); weights: (n_vars, D, L) (pre-transposed vs nn.Linear);
    biases: (n_vars, 1, L).  Returns (B, n_vars, P, L) in x.dtype."""
    B, n_vars, P, D = x.shape
    L = weights.shape[-1]

    x_item = jnp.dtype(x.dtype).itemsize
    w_item = jnp.dtype(weights.dtype).itemsize
    b_item = jnp.dtype(biases.dtype).itemsize

    if batch_tile is None:
        # ~2048 rows per step amortizes the ~0.35 us/step pipeline overhead on
        # every generation; cap so double-buffered x/out tiles stay well inside
        # VMEM (budget << 64 MiB so v7x is never the constraint either).
        target_rows = 2048
        batch_tile = max(1, target_rows // max(P, 1))
        per_b_bytes = 2 * P * (D + L) * x_item              # x + out, double-buffered
        budget = 24 << 20
        batch_tile = min(batch_tile, max(1, budget // max(per_b_bytes, 1)))
    batch_tile = max(1, min(batch_tile, B))
    n_b_tiles = pl.cdiv(B, batch_tile)

    # Explicit scoped-VMEM request (v5e default is only 16 MiB): real footprint
    # (double-buffered activation/output tiles + resident weight/bias) + margin.
    needed = (2 * batch_tile * P * (D + L) * x_item
              + 2 * (D * L * w_item + L * b_item))
    vmem_limit = int(min(max(2 * needed, 32 << 20), 48 << 20))

    # Honest cost estimate: real per-operand itemsizes, unpadded output, no
    # extra transpose passes.
    cost = pl.CostEstimate(
        flops=2 * B * n_vars * P * D * L,
        transcendentals=0,
        bytes_accessed=(B * n_vars * P * D * x_item
                        + n_vars * D * L * w_item
                        + n_vars * L * b_item
                        + B * n_vars * P * L * x_item),
    )

    return pl.pallas_call(
        _head_kernel,
        out_shape=jax.ShapeDtypeStruct((B, n_vars, P, L), x.dtype),
        # variable axis outer, batch-tile axis innermost -> W/b VMEM-resident
        # per variable; both axes "parallel" for megacore (v7x) sharding.
        grid=(n_vars, n_b_tiles),
        in_specs=[
            pl.BlockSpec((batch_tile, None, P, D), lambda v, b: (b, v, 0, 0)),
            pl.BlockSpec((None, D, L), lambda v, b: (v, 0, 0)),
            pl.BlockSpec((None, 1, L), lambda v, b: (v, 0, 0)),
        ],
        out_specs=pl.BlockSpec((batch_tile, None, P, L), lambda v, b: (b, v, 0, 0)),
        compiler_params=pltpu.CompilerParams(
            dimension_semantics=("parallel", "parallel"),
            vmem_limit_bytes=vmem_limit),
        cost_estimate=cost,
    )(x, weights, biases)


def reference_forward(x, weights, biases):
    # Pure-JAX reference mirroring the PyTorch per-variable loop.
    outs = []
    for i in range(x.shape[1]):
        outs.append(x[:, i, :, :] @ weights[i] + biases[i][0])
    return jnp.stack(outs, axis=1)


if __name__ == "__main__":
    # Small shapes consistent with the module's forward.
    B, n_vars, patch_num, d_model, patch_len = 2, 4, 8, 32, 16

    key = jax.random.PRNGKey(0)
    kx, kw, kb = jax.random.split(key, 3)

    x = jax.random.normal(kx, (B, n_vars, patch_num, d_model), dtype=jnp.float32)
    # Per-variable nn.Linear(d_model, patch_len) params, stored pre-transposed
    # as (n_vars, d_model, patch_len); biases as (n_vars, 1, patch_len).
    weights = 0.1 * jax.random.normal(kw, (n_vars, d_model, patch_len), dtype=jnp.float32)
    biases = 0.1 * jax.random.normal(kb, (n_vars, 1, patch_len), dtype=jnp.float32)

    # f32 path: tight correctness check against the reference.
    out = jax.block_until_ready(head_forward(x, weights, biases))
    ref = reference_forward(x, weights, biases)
    assert out.shape == (B, n_vars, patch_num, patch_len)
    assert jnp.allclose(out, ref, atol=1e-5, rtol=1e-5)

    # bf16 end-to-end path (main dtype lever on a bandwidth-bound kernel);
    # accumulation stays f32 inside the kernel.
    out_bf16 = jax.block_until_ready(
        head_forward(x.astype(jnp.bfloat16),
                     weights.astype(jnp.bfloat16),
                     biases.astype(jnp.bfloat16)))
    assert out_bf16.shape == (B, n_vars, patch_num, patch_len)
    assert jnp.allclose(out_bf16.astype(jnp.float32), ref, atol=1e-1, rtol=1e-1)

    print("KERNEL_OK")
</pallas_src>

<mosaic_0001>
module attributes {stable_mosaic.version = 11 : i64} {
  func.func @_head_kernel(%arg0: i32, %arg1: i32, %arg2: memref<2x1x8x32xf32, #tpu.memory_space<vmem>>, %arg3: memref<1x32x16xf32, #tpu.memory_space<vmem>>, %arg4: memref<1x1x16xf32, #tpu.memory_space<vmem>>, %arg5: memref<2x1x8x16xf32, #tpu.memory_space<vmem>>) attributes {dimension_semantics = [#tpu.dimension_semantics<parallel>, #tpu.dimension_semantics<parallel>], iteration_bounds = array<i64: 4, 1>, scalar_prefetch = 0 : i64, scratch_operands = 0 : i64, tpu.core_type = #tpu.core_type<tc>, window_params = [{transform_indices = @transform_0, window_bounds = array<i64: 2, 1, 8, 32>}, {transform_indices = @transform_1, window_bounds = array<i64: 1, 32, 16>}, {transform_indices = @transform_2, window_bounds = array<i64: 1, 1, 16>}, {transform_indices = @transform_3, window_bounds = array<i64: 2, 1, 8, 16>}]} {
    %c0 = arith.constant 0 : index
    %c0_0 = arith.constant 0 : index
    %c0_1 = arith.constant 0 : index
    %c0_2 = arith.constant 0 : index
    %0 = vector.load %arg2[%c0, %c0_0, %c0_1, %c0_2] : memref<2x1x8x32xf32, #tpu.memory_space<vmem>>, vector<2x1x8x32xf32>
    %1 = vector.shape_cast %0 : vector<2x1x8x32xf32> to vector<2x8x32xf32>
    %2 = vector.shape_cast %1 : vector<2x8x32xf32> to vector<16x32xf32>
    %c0_3 = arith.constant 0 : index
    %c0_4 = arith.constant 0 : index
    %c0_5 = arith.constant 0 : index
    %3 = vector.load %arg3[%c0_3, %c0_4, %c0_5] : memref<1x32x16xf32, #tpu.memory_space<vmem>>, vector<1x32x16xf32>
    %4 = vector.shape_cast %3 : vector<1x32x16xf32> to vector<32x16xf32>
    %cst = arith.constant dense<0.000000e+00> : vector<16x16xf32>
    %5 = tpu.matmul %2, %4, %cst {dimension_numbers = #tpu.dot_dimension_numbers<[1], [0], [0], [1], [0, 0, 1, 1], [], []>} : vector<16x32xf32>, vector<32x16xf32>, vector<16x16xf32> -> vector<16x16xf32>
    %c0_6 = arith.constant 0 : index
    %c0_7 = arith.constant 0 : index
    %c0_8 = arith.constant 0 : index
    %6 = vector.load %arg4[%c0_6, %c0_7, %c0_8] : memref<1x1x16xf32, #tpu.memory_space<vmem>>, vector<1x1x16xf32>
    %7 = vector.shape_cast %6 : vector<1x1x16xf32> to vector<1x16xf32>
    %8 = vector.broadcast %7 : vector<1x16xf32> to vector<16x16xf32>
    %9 = arith.addf %5, %8 : vector<16x16xf32>
    %10 = vector.shape_cast %9 : vector<16x16xf32> to vector<2x8x16xf32>
    %c0_9 = arith.constant 0 : index
    %c0_10 = arith.constant 0 : index
    %c0_11 = arith.constant 0 : index
    %c0_12 = arith.constant 0 : index
    %11 = vector.load %arg5[%c0_9, %c0_10, %c0_11, %c0_12] : memref<2x1x8x16xf32, #tpu.memory_space<vmem>>, vector<2x1x8x16xf32>
    %12 = vector.shape_cast %11 : vector<2x1x8x16xf32> to vector<2x8x16xf32>
    %13 = vector.shape_cast %10 : vector<2x8x16xf32> to vector<2x1x8x16xf32>
    tpu.vector_store %arg5[%c0_9, %c0_10, %c0_11, %c0_12], %13 {strides = array<i32>} : memref<2x1x8x16xf32, #tpu.memory_space<vmem>>, vector<2x1x8x16xf32>,
    return
  }
  func.func @transform_0(%arg0: i32, %arg1: i32) -> (i32, i32, i32, i32) {
    %c0_i32 = arith.constant 0 : i32
    %c0_i32_0 = arith.constant 0 : i32
    %c0_i32_1 = arith.constant 0 : i32
    return %arg1, %arg0, %c0_i32, %c0_i32_0 : i32, i32, i32, i32
  }
  func.func @transform_1(%arg0: i32, %arg1: i32) -> (i32, i32, i32) {
    %c0_i32 = arith.constant 0 : i32
    %c0_i32_0 = arith.constant 0 : i32
    %c0_i32_1 = arith.constant 0 : i32
    return %arg0, %c0_i32, %c0_i32_0 : i32, i32, i32
  }
  func.func @transform_2(%arg0: i32, %arg1: i32) -> (i32, i32, i32) {
    %c0_i32 = arith.constant 0 : i32
    %c0_i32_0 = arith.constant 0 : i32
    %c0_i32_1 = arith.constant 0 : i32
    return %arg0, %c0_i32, %c0_i32_0 : i32, i32, i32
  }
  func.func @transform_3(%arg0: i32, %arg1: i32) -> (i32, i32, i32, i32) {
    %c0_i32 = arith.constant 0 : i32
    %c0_i32_0 = arith.constant 0 : i32
    %c0_i32_1 = arith.constant 0 : i32
    return %arg1, %arg0, %c0_i32, %c0_i32_0 : i32, i32, i32, i32
  }
}

</mosaic_0001>

<llo_original>
// kernel: tpu_custom_call.1
$region0: #{tpu_custom_call.1}
  #allocation0 [shape = 'u32[]', space=smem, size = 0x4, offset = 0x4, fixed_abs, tag = 'smem constant byte address 0x4 - core index']
  #allocation1 [shape = 'u32[144,128]{1,0:T(1,128)}', space=vmem, size = 0x12000, scoped, tag = 'internal scratch']
  %s0 = inlined_call_operand.vmem [shape: f32[2,4,8,32], index: 0, kind: input, shape index: {}]
  %s1 = inlined_call_operand.vmem [shape: f32[4,32,16], index: 1, kind: input, shape index: {}]
  %s2 = inlined_call_operand.vmem [shape: f32[4,1,16], index: 2, kind: input, shape index: {}]
  %s3 = inlined_call_operand.hbm [shape: f32[2,4,8,16], index: 3, kind: output, shape index: {}]
  %s4 = sld [smem:[#allocation0]]
  $region83: #{tpu_custom_call.1} parent=0
    _
  %s6 = ssub.s32 1, %s4
  %s7 = scalar_select 0, %s6, %s4
  $region1: #{tpu_custom_call.1} parent=0
    #allocation2 [shape = 'u8[16384]{0}', space=vmem, size = 0x4000, scoped, tag = 'input window, operand 0']
    #allocation3 [shape = 'u8[16384]{0}', space=vmem, size = 0x4000, scoped, tag = 'output window, operand 0']
    #allocation4 [shape = 's32[2]{0}', space=sflag, size = 0x8, scoped, tag = 'scoped memory for tpu_custom_call.1']
    %8 = vsyncpa [#allocation4], 0
    %s9 = scalar_lea.sflag [#allocation4], 1
    %10 = vsyncpa %s9, 0
    loop: start=0, step=1, limit=6
    $region2: #{tpu_custom_call.1} parent=1 // loop_pre_header
      _
    $region3: #{tpu_custom_call.1} parent=1 // loop_header
      %s12 = sphi 0, %s16
      %p13 = scmp.ge.s32.totalorder %s12, 6
      %s19 = sphi 0, %s31
      %s20 = sphi 0, %s27
      %s21 = sphi 0, %s19
      %s22 = sphi 0, %s20
      %s23 = sphi 0, %s21
      %s24 = sphi 0, %s22
      %s36 = sphi 0, %s38
      %s39 = sphi 0, %s36
      %s40 = sphi 0, %s39
      %s56 = sphi 0, %s40
      %s62 = sphi 0, %s64
      %s65 = sphi 0, %s62
      %s66 = sphi 0, %s65
      %s82 = sphi 0, %s66
      %s88 = sphi 0, %s90
      %s91 = sphi 0, %s88
      %s92 = sphi 0, %s91
      %s108 = sphi 0, %s92
      %s116 = sphi 0, %s118
      %s119 = sphi 0, %s116
      %s120 = sphi 0, %s119
      %s136 = sphi 0, %s120
    $region4: #{tpu_custom_call.1} parent=1 // loop_header_branch
      %15 = sbr.rel (%p13) target = $region8
    $region5: #{tpu_custom_call.1} parent=1 // loop_body
      %s17 = ssub.s32 %s12, 1
      %s18 = ssub.s32 %s12, 2
      %s25 = sadd.s32 1, %s20
      %p26 = scmp.ge.s32.totalorder %s25, 1
      %s27 = scalar_select %p26, 0, %s25
      %s28 = sadd.s32 1, %s19
      %s29 = scalar_select %p26, %s28, %s19
      %p30 = scmp.ge.s32.totalorder %s29, 4
      %s31 = scalar_select %p30, 0, %s29
      %s32 = ssub.s32 %s20, %s27
      %s33 = ssub.s32 %s19, %s31
      %s34 = sor.u32 %s32, %s33
      %p35 = scmp.eq.s32.totalorder %s34, 0
      %s37 = sadd.s32 %s36, 1
      %s38 = scalar_select %p35, %s36, %s37
      %p41 = pneg %p35
      %p42 = scmp.eq.s32.totalorder %s12, 3
      %p43 = por %p41, %p42
      %p44 = scmp.ne.s32.totalorder %s36, %s39
      %p45 = scmp.eq.s32.totalorder %s12, 0
      %p46 = por %p44, %p45
      %p47 = scmp.ne.s32.totalorder %s36, %s39
      %p48 = scmp.eq.s32.totalorder %s17, 3
      %p49 = por %p47, %p48
      %p50 = scmp.ne.s32.totalorder %s39, %s40
      %p51 = scmp.eq.s32.totalorder %s17, 0
      %p52 = por %p50, %p51
      %p53 = scmp.ne.s32.totalorder %s39, %s40
      %p54 = scmp.eq.s32.totalorder %s18, 3
      %p55 = por %p53, %p54
      %p57 = scmp.ne.s32.totalorder %s40, %s56
      %p58 = scmp.eq.s32.totalorder %s18, 0
      %p59 = por %p57, %p58
      %s60 = ssub.s32 %s19, %s31
      %p61 = scmp.eq.s32.totalorder %s60, 0
      %s63 = sadd.s32 %s62, 1
      %s64 = scalar_select %p61, %s62, %s63
      %p67 = pneg %p61
      %p68 = scmp.eq.s32.totalorder %s12, 3
      %p69 = por %p67, %p68
      %p70 = scmp.ne.s32.totalorder %s62, %s65
      %p71 = scmp.eq.s32.totalorder %s12, 0
      %p72 = por %p70, %p71
      %p73 = scmp.ne.s32.totalorder %s62, %s65
      %p74 = scmp.eq.s32.totalorder %s17, 3
      %p75 = por %p73, %p74
      %p76 = scmp.ne.s32.totalorder %s65, %s66
      %p77 = scmp.eq.s32.totalorder %s17, 0
      %p78 = por %p76, %p77
      %p79 = scmp.ne.s32.totalorder %s65, %s66
      %p80 = scmp.eq.s32.totalorder %s18, 3
      %p81 = por %p79, %p80
      %p83 = scmp.ne.s32.totalorder %s66, %s82
      %p84 = scmp.eq.s32.totalorder %s18, 0
      %p85 = por %p83, %p84
      %s86 = ssub.s32 %s19, %s31
      %p87 = scmp.eq.s32.totalorder %s86, 0
      %s89 = sadd.s32 %s88, 1
      %s90 = scalar_select %p87, %s88, %s89
      %p93 = pneg %p87
      %p94 = scmp.eq.s32.totalorder %s12, 3
      %p95 = por %p93, %p94
      %p96 = scmp.ne.s32.totalorder %s88, %s91
      %p97 = scmp.eq.s32.totalorder %s12, 0
      %p98 = por %p96, %p97
      %p99 = scmp.ne.s32.totalorder %s88, %s91
      %p100 = scmp.eq.s32.totalorder %s17, 3
      %p101 = por %p99, %p100
      %p102 = scmp.ne.s32.totalorder %s91, %s92
      %p103 = scmp.eq.s32.totalorder %s17, 0
      %p104 = por %p102, %p103
      %p105 = scmp.ne.s32.totalorder %s91, %s92
      %p106 = scmp.eq.s32.totalorder %s18, 3
      %p107 = por %p105, %p106
      %p109 = scmp.ne.s32.totalorder %s92, %s108
      %p110 = scmp.eq.s32.totalorder %s18, 0
      %p111 = por %p109, %p110
      %s112 = ssub.s32 %s20, %s27
      %s113 = ssub.s32 %s19, %s31
      %s114 = sor.u32 %s112, %s113
      %p115 = scmp.eq.s32.totalorder %s114, 0
      %s117 = sadd.s32 %s116, 1
      %s118 = scalar_select %p115, %s116, %s117
      %p121 = pneg %p115
      %p122 = scmp.eq.s32.totalorder %s12, 3
      %p123 = por %p121, %p122
      %p124 = scmp.ne.s32.totalorder %s116, %s119
      %p125 = scmp.eq.s32.totalorder %s12, 0
      %p126 = por %p124, %p125
      %p127 = scmp.ne.s32.totalorder %s116, %s119
      %p128 = scmp.eq.s32.totalorder %s17, 3
      %p129 = por %p127, %p128
      %p130 = scmp.ne.s32.totalorder %s119, %s120
      %p131 = scmp.eq.s32.totalorder %s17, 0
      %p132 = por %p130, %p131
      %p133 = scmp.ne.s32.totalorder %s119, %s120
      %p134 = scmp.eq.s32.totalorder %s18, 3
      %p135 = por %p133, %p134
      %p137 = scmp.ne.s32.totalorder %s120, %s136
      %p138 = scmp.eq.s32.totalorder %s18, 0
      %p139 = por %p137, %p138
      %p140 = scmp.le.s32.totalorder 1, %s12
      %p141 = scmp.lt.s32.totalorder %s12, 5
      %p142 = pnand %p140, %p141
      %p143 = pneg %p142
      // Predicated region
      $region9: #{tpu_custom_call.1} parent=5 // pred_check
        _
      $region10: #{tpu_custom_call.1} parent=5 // pred_check_branch
        %145 = sbr.rel (%p142) target = $region12
      $region11: #{tpu_custom_call.1} parent=5 // pred_region
        %s146 = ssub.s32 %s12, 1
      $region12: #{tpu_custom_call.1} parent=5 // pred_fallthru
        _
      %p147 = scmp.lt.s32.totalorder %s12, 4
      // Predicated region
      $region13: #{tpu_custom_call.1} parent=5 // pred_check
        %p148 = pneg %p147
      $region14: #{tpu_custom_call.1} parent=5 // pred_check_branch
        %150 = sbr.rel (%p148) target = $region16
      $region15: #{tpu_custom_call.1} parent=5 // pred_region
        // Predicated region
        $region17: #{tpu_custom_call.1} parent=15 // pred_check
          %p151 = pneg %p46
        $region18: #{tpu_custom_call.1} parent=15 // pred_check_branch
          %153 = sbr.rel (%p151) target = $region20
        $region19: #{tpu_custom_call.1} parent=15 // pred_region
          %s154 = sand.u32 %s36, 1
          %s155 = sand.u32 %s36, 1
          %s156 = smul.addr %s155, 16
          %s157 = scalar_lea.vmem [#allocation2], %s156
          %s158 = smul.u32 2, %s20
          %s159 = smul.addr %s158, 4
          %s160 = sadd.s32 %s19, %s159
          %s161 = smul.addr %s160, 8
          %s162 = scalar_lea.vmem %s0, %s161
          // Predicated region
          $region21: #{tpu_custom_call.1} parent=19 // pred_check
            _
          $region22: #{tpu_custom_call.1} parent=19 // pred_check_branch
            %164 = sbr.rel (0) target = $region24
          $region23: #{tpu_custom_call.1} parent=19 // pred_region
            // Predicated region
            $region25: #{tpu_custom_call.1} parent=23 // pred_check
              _
            $region26: #{tpu_custom_call.1} parent=23 // pred_check_branch
              %166 = sbr.rel (0) target = $region28
            $region27: #{tpu_custom_call.1} parent=23 // pred_region
              // Predicated region
              $region40: #{tpu_custom_call.1} parent=27 // pred_check
                _
              $region41: #{tpu_custom_call.1} parent=27 // pred_check_branch
                %184 = sbr.rel (0) target = $region43
              $region42: #{tpu_custom_call.1} parent=27 // pred_region
                loop: start=0, step=1, limit=1
                $region44: #{tpu_custom_call.1} parent=42 // loop_pre_header
                  _
                $region45: #{tpu_custom_call.1} parent=42 // loop_header
                  %s186 = sphi 0, %s190
                  %p187 = scmp.ge.s32.totalorder %s186, 1
                  %s191 = sphi %s162, %s162
                  %s192 = sphi %s157, %s157
                $region46: #{tpu_custom_call.1} parent=42 // loop_header_branch
                  %189 = sbr.rel (%p187) target = $region50
                $region47: #{tpu_custom_call.1} parent=42 // loop_body
                  %v193 = vld [vmem:[%s191] sm:$0xff]
                  %194 = vst [vmem:[%s192] sm:$0xff] %v193
                  %v195 = vld [vmem:[%s191 + $0x20] sm:$0xff]
                  %196 = vst [vmem:[%s192 + $0x8] sm:$0xff] %v195
                $region48: #{tpu_custom_call.1} parent=42 // loop_footer
                  %s190 = sadd.s32 1, %s186
                $region49: #{tpu_custom_call.1} parent=42 // loop_footer_branch
                  %185 = sbr.rel target = $region45
                $region50: #{tpu_custom_call.1} parent=42 // loop_exit
                  _
              $region43: #{tpu_custom_call.1} parent=27 // pred_fallthru
                _
              // Predicated region
              $region51: #{tpu_custom_call.1} parent=27 // pred_check
                _
              $region52: #{tpu_custom_call.1} parent=27 // pred_check_branch
                %198 = sbr.rel target = $region54
              $region53: #{tpu_custom_call.1} parent=27 // pred_region
                _
              $region54: #{tpu_custom_call.1} parent=27 // pred_fallthru
                _
            $region28: #{tpu_custom_call.1} parent=23 // pred_fallthru
              _
            // Predicated region
            $region29: #{tpu_custom_call.1} parent=23 // pred_check
              _
            $region30: #{tpu_custom_call.1} parent=23 // pred_check_branch
              %168 = sbr.rel target = $region32
            $region31: #{tpu_custom_call.1} parent=23 // pred_region
              %s170 = ssub.s32 256, 1
              loop: start=0, step=1, limit=1
              $region33: #{tpu_custom_call.1} parent=31 // loop_pre_header
                _
              $region34: #{tpu_custom_call.1} parent=31 // loop_header
                %s172 = sphi 0, %s176
                %p173 = scmp.ge.s32.totalorder %s172, 1
                %s177 = sphi %s162, %s162
                %s178 = sphi %s157, %s157
              $region35: #{tpu_custom_call.1} parent=31 // loop_header_branch
                %175 = sbr.rel (%p173) target = $region39
              $region36: #{tpu_custom_call.1} parent=31 // loop_body
                %v179 = vld [vmem:[%s177] sm:%s170]
                %180 = vst [vmem:[%s178] sm:%s170] %v179
                %v181 = vld [vmem:[%s177 + $0x20] sm:%s170]
                %182 = vst [vmem:[%s178 + $0x8] sm:%s170] %v181
              $region37: #{tpu_custom_call.1} parent=31 // loop_footer
                %s176 = sadd.s32 1, %s172
              $region38: #{tpu_custom_call.1} parent=31 // loop_footer_branch
                %171 = sbr.rel target = $region34
              $region39: #{tpu_custom_call.1} parent=31 // loop_exit
                _
            $region32: #{tpu_custom_call.1} parent=23 // pred_fallthru
              _
          $region24: #{tpu_custom_call.1} parent=19 // pred_fallthru
            _
          %199 = vnop
        $region20: #{tpu_custom_call.1} parent=15 // pred_fallthru
          _
        // Predicated region
        $region55: #{tpu_custom_call.1} parent=15 // pred_check
          %p200 = pneg %p72
        $region56: #{tpu_custom_call.1} parent=15 // pred_check_branch
          %202 = sbr.rel (%p200) target = $region58
        $region57: #{tpu_custom_call.1} parent=15 // pred_region
          %p203 = scmp.lt.s32.totalorder %s19, 3
          %s204 = scalar_select %p203, %s19, 3
          %s205 = smul.addr %s204, 4
          %s206 = smul.addr %s205, 8
          %s207 = scalar_lea.vmem %s1, %s206
        $region58: #{tpu_custom_call.1} parent=15 // pred_fallthru
          _
        // Predicated region
        $region59: #{tpu_custom_call.1} parent=15 // pred_check
          %p208 = pneg %p98
        $region60: #{tpu_custom_call.1} parent=15 // pred_check_branch
          %210 = sbr.rel (%p208) target = $region62
        $region61: #{tpu_custom_call.1} parent=15 // pred_region
          %p211 = scmp.lt.s32.totalorder %s19, 3
          %s212 = scalar_select %p211, %s19, 3
          %s213 = scalar_lea.vmem %s2, %s212
        $region62: #{tpu_custom_call.1} parent=15 // pred_fallthru
          _
      $region16: #{tpu_custom_call.1} parent=5 // pred_fallthru
        _
      %p214 = scmp.le.s32.totalorder 1, %s12
      %p215 = scmp.lt.s32.totalorder %s12, 5
      %p216 = pnand %p214, %p215
      %p217 = pneg %p216
      // Predicated region
      $region63: #{tpu_custom_call.1} parent=5 // pred_check
        _
      $region64: #{tpu_custom_call.1} parent=5 // pred_check_branch
        %219 = sbr.rel (%p216) target = $region66
      $region65: #{tpu_custom_call.1} parent=5 // pred_region
        %s220 = ssub.s32 %s12, 1
        %s221 = sand.u32 %s39, 1
        %s222 = sand.u32 %s39, 1
        %s223 = smul.addr %s222, 16
        %s224 = scalar_lea.vmem [#allocation2], %s223
        // Predicated region
        $region67: #{tpu_custom_call.1} parent=65 // pred_check
          %p225 = pneg %p52
        $region68: #{tpu_custom_call.1} parent=65 // pred_check_branch
          %227 = sbr.rel (%p225) target = $region70
        $region69: #{tpu_custom_call.1} parent=65 // pred_region
          _
        $region70: #{tpu_custom_call.1} parent=65 // pred_fallthru
          _
        %s228 = sand.u32 %s39, 1
        %s229 = sand.u32 %s39, 1
        %s230 = smul.addr %s229, 16
        %s231 = scalar_lea.vmem [#allocation2], %s230
        %p232 = pneg %p52
        %p233 = pneg %p49
        %p234 = scmp.lt.s32.totalorder %s21, 3
        %s235 = scalar_select %p234, %s21, 3
        %s236 = smul.addr %s235, 4
        %s237 = smul.addr %s236, 8
        %s238 = scalar_lea.vmem %s1, %s237
        %p239 = pneg %p78
        %p240 = pneg %p75
        %p241 = scmp.lt.s32.totalorder %s21, 3
        %s242 = scalar_select %p241, %s21, 3
        %s243 = scalar_lea.vmem %s2, %s242
        %p244 = pneg %p104
        %p245 = pneg %p101
        %p246 = pneg %p132
        %p247 = pneg %p129
        %s248 = sand.u32 %s119, 1
        %s249 = scalar_lea.sflag [#allocation4], %s248
        %s250 = sand.u32 %s119, 1
        %s251 = smul.addr %s250, 16
        %s252 = scalar_lea.vmem [#allocation3], %s251
        %s253 = smul.u32 2, %s22
        %p254 = scmp.lt.s32.totalorder %s21, 3
        %s255 = scalar_select %p254, %s21, 3
        %s256 = smul.addr %s255, 4
        %s257 = smul.addr %s256, 8
        %s258 = scalar_lea.vmem %s1, %s257
        %p259 = scmp.lt.s32.totalorder %s21, 3
        %s260 = scalar_select %p259, %s21, 3
        %s261 = scalar_lea.vmem %s2, %s260
        %s262 = smul.u32 2, %s22
        %v263 = vld [vmem:[%s224] sm:$0xff]
        %v264 = vld [vmem:[%s224 + $0x8] sm:$0xff]
        %v265 = vld [vmem:[%s258] sm:$0xff]
        %v266 = vld [vmem:[%s258 + $0x8] sm:$0xff]
        %v267 = vld [vmem:[%s258 + $0x10] sm:$0xff]
        %v268 = vld [vmem:[%s258 + $0x18] sm:$0xff]
        %v269 = vld [vmem:[%s261] sm:$0x1]
        %v271 = vlaneseq
        %v272 = vshrl.u32 %v271, 7
        %v273 = vsub.s32 0, %v272
        %v274 = vrot.slane %v269, %v273
        %vm276 = vcmask 261120
        %v278 = vsel %vm276, %v263, 0
        %v281 = vsel %vm276, %v264, 0
        %283 = vmatprep.subr.mxu0 0.0
        %284 = vmatpush1.msra.mxu0 0.0
        %285 = vmatprep.subr.mxu0 0.0
        %286 = vmatpush1.msra.mxu0 0.0
        %287 = vmatprep.subr.mxu0 0.0
        %288 = vmatpush1.msra.mxu0 0.0
        %289 = vmatprep.subr.mxu0 0.0
        %290 = vmatpush1.msra.mxu0 0.0
        %291 = vmatprep.subr.mxu0 0.0
        %292 = vmatpush1.msra.mxu0 0.0
        %293 = vmatprep.subr.mxu0 0.0
        %294 = vmatpush1.msra.mxu0 0.0
        %295 = vmatprep.subr.mxu0 0.0
        %296 = vmatpush1.msra.mxu0 0.0
        %297 = vmatprep.subr.mxu0 0.0
        %298 = vmatpush1.msra.mxu0 0.0
        %299 = vmatprep.subr.mxu0 0.0
        %300 = vmatpush1.msra.mxu0 0.0
        %301 = vmatprep.subr.mxu0 0.0
        %302 = vmatpush1.msra.mxu0 0.0
        %303 = vmatprep.subr.mxu0 0.0
        %304 = vmatpush1.msra.mxu0 0.0
        %305 = vmatprep.subr.mxu0 0.0
        %306 = vmatpush1.msra.mxu0 0.0
        %307 = vmatprep.subr.mxu0 0.0
        %308 = vmatpush1.msra.mxu0 %v268
        %309 = vmatprep.subr.mxu0 0.0
        %310 = vmatpush1.msra.mxu0 %v267
        %311 = vmatprep.subr.mxu0 0.0
        %312 = vmatpush1.msra.mxu0 %v266
        %313 = vmatprep.subr.mxu0 0.0
        %314 = vmatpush1.msra.mxu0 %v265
        %315 = vmatprep.subr.mxu0 0.0
        %316 = vmatpush2.msra.mxu0 0.0
        %317 = vmatprep.subr.mxu0 0.0
        %318 = vmatpush2.msra.mxu0 0.0
        %319 = vmatprep.subr.mxu0 0.0
        %320 = vmatpush2.msra.mxu0 0.0
        %321 = vmatprep.subr.mxu0 0.0
        %322 = vmatpush2.msra.mxu0 0.0
        %323 = vmatprep.subr.mxu0 0.0
        %324 = vmatpush2.msra.mxu0 0.0
        %325 = vmatprep.subr.mxu0 0.0
        %326 = vmatpush2.msra.mxu0 0.0
        %327 = vmatprep.subr.mxu0 0.0
        %328 = vmatpush2.msra.mxu0 0.0
        %329 = vmatprep.subr.mxu0 0.0
        %330 = vmatpush2.msra.mxu0 0.0
        %331 = vmatprep.subr.mxu0 0.0
        %332 = vmatpush2.msra.mxu0 0.0
        %333 = vmatprep.subr.mxu0 0.0
        %334 = vmatpush2.msra.mxu0 0.0
        %335 = vmatprep.subr.mxu0 0.0
        %336 = vmatpush2.msra.mxu0 0.0
        %337 = vmatprep.subr.mxu0 0.0
        %338 = vmatpush2.msra.mxu0 0.0
        %339 = vmatprep.subr.mxu0 0.0
        %340 = vmatpush2.msra.mxu0 0.0
        %341 = vmatprep.subr.mxu0 0.0
        %342 = vmatpush2.msra.mxu0 0.0
        %343 = vmatprep.subr.mxu0 0.0
        %344 = vmatpush2.msra.mxu0 0.0
        %345 = vmatprep.subr.mxu0 0.0
        %346 = vmatpush2.msra.mxu0 0.0
        %347 = vmatprep.mubr.f32.mxu0 0.0
        %348 = vmatmul.mubr.f32.gmra.mxu0 %v278
        %v349 = vpop.f32.mrf.mxu0
        %v350 = vadd.f32 %v274, %v349
        %v351 = vpop.f32.mrf.mxu0
        %352 = vmatprep.mubr.f32.mxu0 0.0
        %353 = vmatmul.mubr.f32.gmra.mxu0 %v281
        %v354 = vpop.f32.mrf.mxu0
        %v355 = vadd.f32 %v274, %v354
        %v356 = vpop.f32.mrf.mxu0
        %357 = vdwg.mxu0
        %vm358 = vcmask 130048
        %359 = vst.msk [vmem:[%s252] sm:$0xff] %vm358, %v350
        %360 = vst.msk [vmem:[%s252 + $0x8] sm:$0xff] %vm358, %v355
        %s361 = sand.u32 %s119, 1
        %s362 = scalar_lea.sflag [#allocation4], %s361
        %s363 = sand.u32 %s119, 1
        %s364 = smul.addr %s363, 16
        %s365 = scalar_lea.vmem [#allocation3], %s364
        // Predicated region
        $region71: #{tpu_custom_call.1} parent=65 // pred_check
          %p366 = pneg %p129
        $region72: #{tpu_custom_call.1} parent=65 // pred_check_branch
          %368 = sbr.rel (%p366) target = $region74
        $region73: #{tpu_custom_call.1} parent=65 // pred_region
          %s369 = smul.u32 2, %s22
          %s371 = ssub.s32 256, 256
          %372 = vsyncadd %s362, %s371
          %s373 = smul.addr %s369, 4
          %s374 = sadd.s32 %s21, %s373
          %s375 = smul.addr %s374, 128
          %s376 = scalar_lea.hbm %s3, %s375
          %s377 = sshll.u32 %s365, 4
          %s378 = int_to_ptr.vmem [resolvable:$true] %s377
          %383 = dma.vmem_to_hbm [thread:$0]  %s378, 256, %s376, %s362, 128, 512, 8
        $region74: #{tpu_custom_call.1} parent=65 // pred_fallthru
          _
      $region66: #{tpu_custom_call.1} parent=5 // pred_fallthru
        _
      %p384 = scmp.le.s32.totalorder 2, %s12
      // Predicated region
      $region75: #{tpu_custom_call.1} parent=5 // pred_check
        %p385 = pneg %p384
      $region76: #{tpu_custom_call.1} parent=5 // pred_check_branch
        %387 = sbr.rel (%p385) target = $region78
      $region77: #{tpu_custom_call.1} parent=5 // pred_region
        %s388 = ssub.s32 %s12, 2
        // Predicated region
        $region79: #{tpu_custom_call.1} parent=77 // pred_check
          %p389 = pneg %p135
        $region80: #{tpu_custom_call.1} parent=77 // pred_check_branch
          %391 = sbr.rel (%p389) target = $region82
        $region81: #{tpu_custom_call.1} parent=77 // pred_region
          %s392 = sand.u32 %s120, 1
          %s393 = scalar_lea.sflag [#allocation4], %s392
          %s394 = sand.u32 %s120, 1
          %s395 = smul.addr %s394, 16
          %s396 = scalar_lea.vmem [#allocation3], %s395
          %397 = dma.done %s393, 256
        $region82: #{tpu_custom_call.1} parent=77 // pred_fallthru
          _
      $region78: #{tpu_custom_call.1} parent=5 // pred_fallthru
        _
    $region6: #{tpu_custom_call.1} parent=1 // loop_footer
      %s16 = sadd.s32 1, %s12
    $region7: #{tpu_custom_call.1} parent=1 // loop_footer_branch
      %11 = sbr.rel target = $region3
    $region8: #{tpu_custom_call.1} parent=1 // loop_exit
      _
    %398 = vsyncpa [#allocation4], 1
    %s399 = scalar_lea.sflag [#allocation4], 1
    %400 = vsyncpa %s399, 1

</llo_original>
